<compile_context>
chip_gen: v6e
topology: v6e:2x2x1
jax: 0.10.0
libtpu: 0.0.40
codegen_flags: <defaults>
</compile_context>

<pallas_src>
import functools

import jax
import jax.numpy as jnp
from jax.experimental import pallas as pl
from jax.experimental.pallas import tpu as pltpu

_LANE = 128


def _round_up(x, m):
    return ((x + m - 1) // m) * m


def rpe_mlp_kernel(x_ref,
                   w1_ref, b1_ref,
                   w2_ref, b2_ref,
                   w3_ref, b3_ref,
                   w4_ref, b4_ref,
                   w5_ref, b5_ref,
                   o_ref):
    def layer(h, w_ref, b_ref, out_dtype):
        acc = jnp.dot(h, w_ref[...], preferred_element_type=jnp.float32)  # MXU
        acc = jnp.maximum(acc + b_ref[...], 0.0)          # bias + ReLU, f32 VPU
        return acc.astype(out_dtype)

    h = x_ref[...].astype(jnp.bfloat16)                   # cast in-kernel
    h = layer(h, w1_ref, b1_ref, jnp.bfloat16)
    h = layer(h, w2_ref, b2_ref, jnp.bfloat16)
    h = layer(h, w3_ref, b3_ref, jnp.bfloat16)
    h = layer(h, w4_ref, b4_ref, jnp.bfloat16)
    o_ref[...] = layer(h, w5_ref, b5_ref, o_ref.dtype)    # ReLU on fc5 too


def _choose_batch_tile(B):
    """Multiple of 16 sublanes, <= 1024 rows, and <= B/2 when possible so the
    parallel grid axis has >= 2 steps (v7x megacore)."""
    if B < 32 or B % 16 != 0:
        return B
    best = 16
    cap = min(1024, B // 2)
    t = 16
    while t <= cap:
        if B % t == 0:
            best = t
        t += 16
    return best


@functools.partial(jax.jit, static_argnames=("batch_tile",))
def rpe_model_forward(x, params, *, batch_tile=None):
    """x: [B, input_size].  params: list of (W, b) with W [in, out], b [1, out]."""
    B, in_size = x.shape
    out_size = params[-1][0].shape[1]

    # Pad each layer's output dim (and the matching next-layer input dim) up
    # to a multiple of 128 lanes.  Layer-1 input dim is left as-is so x itself
    # is not padded.
    dims = [in_size] + [w.shape[1] for w, _ in params]
    pdims = [dims[0]] + [_round_up(d, _LANE) for d in dims[1:]]

    padded = []
    for i, (w, b) in enumerate(params):
        wp = jnp.zeros((pdims[i], pdims[i + 1]), jnp.bfloat16)
        wp = wp.at[: w.shape[0], : w.shape[1]].set(w.astype(jnp.bfloat16))
        bp = jnp.zeros((1, pdims[i + 1]), jnp.float32)
        bp = bp.at[:, : b.shape[1]].set(b.astype(jnp.float32))
        padded.append((wp, bp))

    if batch_tile is None:
        batch_tile = _choose_batch_tile(B)
    assert B % batch_tile == 0

    flat_args = []
    in_specs = [pl.BlockSpec((batch_tile, in_size), lambda i: (i, 0))]
    for w, b in padded:
        flat_args += [w, b]
        # Constant index_map -> same block every grid step (weights resident).
        in_specs.append(pl.BlockSpec(w.shape, lambda i: (0, 0)))
        in_specs.append(pl.BlockSpec(b.shape, lambda i: (0, 0)))

    out_pad = pdims[-1]
    out_spec = pl.BlockSpec((batch_tile, out_pad), lambda i: (i, 0))

    flops = 2 * B * sum(pdims[i] * pdims[i + 1] for i in range(len(padded)))
    weight_bytes = sum(w.size * w.dtype.itemsize + b.size * b.dtype.itemsize
                       for w, b in padded)
    bytes_accessed = x.size * x.dtype.itemsize + B * out_pad * 4 + weight_bytes
    cost = pl.CostEstimate(flops=flops, transcendentals=0,
                           bytes_accessed=bytes_accessed)

    out_padded = pl.pallas_call(
        rpe_mlp_kernel,
        out_shape=jax.ShapeDtypeStruct((B, out_pad), jnp.float32),
        grid_spec=pltpu.PrefetchScalarGridSpec(
            num_scalar_prefetch=0,
            grid=(B // batch_tile,),
            in_specs=in_specs,
            out_specs=out_spec,
        ),
        compiler_params=pltpu.CompilerParams(
            dimension_semantics=("parallel",),
            vmem_limit_bytes=32 * 1024 * 1024,
        ),
        cost_estimate=cost,
    )(x, *flat_args)

    # Slice the real output columns off the lane-dense padded result.
    return out_padded[:, :out_size]


def init_params(key, input_size, output_size):
    """Deterministic init matching RPEModel layer shapes.

    Weights stored as [in, out] (transpose of PyTorch nn.Linear.weight),
    biases as [1, out]."""
    dims = [input_size, 128, 256, 128, 64, output_size]
    params = []
    for i in range(len(dims) - 1):
        key, kw, kb = jax.random.split(key, 3)
        bound = 1.0 / jnp.sqrt(dims[i])       # PyTorch default uniform bound
        w = jax.random.uniform(kw, (dims[i], dims[i + 1]),
                               minval=-bound, maxval=bound, dtype=jnp.float32)
        b = jax.random.uniform(kb, (1, dims[i + 1]),
                               minval=-bound, maxval=bound, dtype=jnp.float32)
        params.append((w, b))
    return params


def rpe_model_ref(x, params, *, use_bf16=True):
    """Pure-JAX reference; use_bf16=True mirrors the kernel's numerics."""
    h = x.astype(jnp.bfloat16) if use_bf16 else x
    n = len(params)
    for i, (w, b) in enumerate(params):
        wc = w.astype(jnp.bfloat16) if use_bf16 else w
        acc = jnp.dot(h, wc, preferred_element_type=jnp.float32)
        acc = jnp.maximum(acc + b, 0.0)
        h = acc.astype(jnp.bfloat16) if (use_bf16 and i < n - 1) else acc
    return h


if __name__ == "__main__":
    input_size = 32
    output_size = 16
    batch = 8

    key = jax.random.PRNGKey(0)
    key, kx = jax.random.split(key)
    x = jax.random.normal(kx, (batch, input_size), dtype=jnp.float32)
    params = init_params(key, input_size, output_size)

    out = jax.block_until_ready(rpe_model_forward(x, params))
    assert out.shape == (batch, output_size)

    # Numerics-matched (bf16 operands, f32 accumulation) reference.
    ref_bf16 = rpe_model_ref(x, params, use_bf16=True)
    assert jnp.allclose(out, ref_bf16, atol=1e-2, rtol=1e-2), (
        float(jnp.max(jnp.abs(out - ref_bf16))))

    # Loose check against full-f32 math (bf16 operand rounding only).
    ref_f32 = rpe_model_ref(x, params, use_bf16=False)
    assert jnp.allclose(out, ref_f32, atol=5e-2, rtol=5e-2), (
        float(jnp.max(jnp.abs(out - ref_f32))))

    print("KERNEL_OK")
</pallas_src>

<mosaic_0001>
module attributes {stable_mosaic.version = 11 : i64} {
  func.func @rpe_mlp_kernel(%arg0: i32, %arg1: memref<8x32xf32, #tpu.memory_space<vmem>>, %arg2: memref<32x128xbf16, #tpu.memory_space<vmem>>, %arg3: memref<1x128xf32, #tpu.memory_space<vmem>>, %arg4: memref<128x256xbf16, #tpu.memory_space<vmem>>, %arg5: memref<1x256xf32, #tpu.memory_space<vmem>>, %arg6: memref<256x128xbf16, #tpu.memory_space<vmem>>, %arg7: memref<1x128xf32, #tpu.memory_space<vmem>>, %arg8: memref<128x128xbf16, #tpu.memory_space<vmem>>, %arg9: memref<1x128xf32, #tpu.memory_space<vmem>>, %arg10: memref<128x128xbf16, #tpu.memory_space<vmem>>, %arg11: memref<1x128xf32, #tpu.memory_space<vmem>>, %arg12: memref<8x128xf32, #tpu.memory_space<vmem>>) attributes {dimension_semantics = [#tpu.dimension_semantics<parallel>], iteration_bounds = array<i64: 1>, scalar_prefetch = 0 : i64, scratch_operands = 0 : i64, tpu.core_type = #tpu.core_type<tc>, window_params = [{transform_indices = @transform_0, window_bounds = array<i64: 8, 32>}, {pipeline_mode = #tpu.pipeline_mode<synchronous>, transform_indices = @transform_1, window_bounds = array<i64: 32, 128>}, {pipeline_mode = #tpu.pipeline_mode<synchronous>, transform_indices = @transform_2, window_bounds = array<i64: 1, 128>}, {pipeline_mode = #tpu.pipeline_mode<synchronous>, transform_indices = @transform_3, window_bounds = array<i64: 128, 256>}, {pipeline_mode = #tpu.pipeline_mode<synchronous>, transform_indices = @transform_4, window_bounds = array<i64: 1, 256>}, {pipeline_mode = #tpu.pipeline_mode<synchronous>, transform_indices = @transform_5, window_bounds = array<i64: 256, 128>}, {pipeline_mode = #tpu.pipeline_mode<synchronous>, transform_indices = @transform_6, window_bounds = array<i64: 1, 128>}, {pipeline_mode = #tpu.pipeline_mode<synchronous>, transform_indices = @transform_7, window_bounds = array<i64: 128, 128>}, {pipeline_mode = #tpu.pipeline_mode<synchronous>, transform_indices = @transform_8, window_bounds = array<i64: 1, 128>}, {pipeline_mode = #tpu.pipeline_mode<synchronous>, transform_indices = @transform_9, window_bounds = array<i64: 128, 128>}, {pipeline_mode = #tpu.pipeline_mode<synchronous>, transform_indices = @transform_10, window_bounds = array<i64: 1, 128>}, {transform_indices = @transform_11, window_bounds = array<i64: 8, 128>}]} {
    %c0 = arith.constant 0 : index
    %c0_0 = arith.constant 0 : index
    %0 = vector.load %arg1[%c0, %c0_0] : memref<8x32xf32, #tpu.memory_space<vmem>>, vector<8x32xf32>
    %1 = arith.truncf %0 : vector<8x32xf32> to vector<8x32xbf16>
    %c0_1 = arith.constant 0 : index
    %c0_2 = arith.constant 0 : index
    %2 = vector.load %arg2[%c0_1, %c0_2] : memref<32x128xbf16, #tpu.memory_space<vmem>>, vector<32x128xbf16>
    %cst = arith.constant dense<0.000000e+00> : vector<8x128xf32>
    %3 = tpu.matmul %1, %2, %cst {dimension_numbers = #tpu.dot_dimension_numbers<[1], [0], [0], [1], [0, 0, 1, 1], [], []>} : vector<8x32xbf16>, vector<32x128xbf16>, vector<8x128xf32> -> vector<8x128xf32>
    %c0_3 = arith.constant 0 : index
    %c0_4 = arith.constant 0 : index
    %4 = vector.load %arg3[%c0_3, %c0_4] : memref<1x128xf32, #tpu.memory_space<vmem>>, vector<1x128xf32>
    %5 = vector.broadcast %4 : vector<1x128xf32> to vector<8x128xf32>
    %6 = arith.addf %3, %5 : vector<8x128xf32>
    %cst_5 = arith.constant 0.000000e+00 : f32
    %7 = vector.broadcast %cst_5 : f32 to vector<8x128xf32>
    %8 = arith.maximumf %6, %7 : vector<8x128xf32>
    %9 = arith.truncf %8 : vector<8x128xf32> to vector<8x128xbf16>
    %c0_6 = arith.constant 0 : index
    %c0_7 = arith.constant 0 : index
    %10 = vector.load %arg4[%c0_6, %c0_7] : memref<128x256xbf16, #tpu.memory_space<vmem>>, vector<128x256xbf16>
    %cst_8 = arith.constant dense<0.000000e+00> : vector<8x256xf32>
    %11 = tpu.matmul %9, %10, %cst_8 {dimension_numbers = #tpu.dot_dimension_numbers<[1], [0], [0], [1], [0, 0, 1, 1], [], []>} : vector<8x128xbf16>, vector<128x256xbf16>, vector<8x256xf32> -> vector<8x256xf32>
    %c0_9 = arith.constant 0 : index
    %c0_10 = arith.constant 0 : index
    %12 = vector.load %arg5[%c0_9, %c0_10] : memref<1x256xf32, #tpu.memory_space<vmem>>, vector<1x256xf32>
    %13 = vector.broadcast %12 : vector<1x256xf32> to vector<8x256xf32>
    %14 = arith.addf %11, %13 : vector<8x256xf32>
    %cst_11 = arith.constant 0.000000e+00 : f32
    %15 = vector.broadcast %cst_11 : f32 to vector<8x256xf32>
    %16 = arith.maximumf %14, %15 : vector<8x256xf32>
    %17 = arith.truncf %16 : vector<8x256xf32> to vector<8x256xbf16>
    %c0_12 = arith.constant 0 : index
    %c0_13 = arith.constant 0 : index
    %18 = vector.load %arg6[%c0_12, %c0_13] : memref<256x128xbf16, #tpu.memory_space<vmem>>, vector<256x128xbf16>
    %cst_14 = arith.constant dense<0.000000e+00> : vector<8x128xf32>
    %19 = tpu.matmul %17, %18, %cst_14 {dimension_numbers = #tpu.dot_dimension_numbers<[1], [0], [0], [1], [0, 0, 1, 1], [], []>} : vector<8x256xbf16>, vector<256x128xbf16>, vector<8x128xf32> -> vector<8x128xf32>
    %c0_15 = arith.constant 0 : index
    %c0_16 = arith.constant 0 : index
    %20 = vector.load %arg7[%c0_15, %c0_16] : memref<1x128xf32, #tpu.memory_space<vmem>>, vector<1x128xf32>
    %21 = vector.broadcast %20 : vector<1x128xf32> to vector<8x128xf32>
    %22 = arith.addf %19, %21 : vector<8x128xf32>
    %cst_17 = arith.constant 0.000000e+00 : f32
    %23 = vector.broadcast %cst_17 : f32 to vector<8x128xf32>
    %24 = arith.maximumf %22, %23 : vector<8x128xf32>
    %25 = arith.truncf %24 : vector<8x128xf32> to vector<8x128xbf16>
    %c0_18 = arith.constant 0 : index
    %c0_19 = arith.constant 0 : index
    %26 = vector.load %arg8[%c0_18, %c0_19] : memref<128x128xbf16, #tpu.memory_space<vmem>>, vector<128x128xbf16>
    %cst_20 = arith.constant dense<0.000000e+00> : vector<8x128xf32>
    %27 = tpu.matmul %25, %26, %cst_20 {dimension_numbers = #tpu.dot_dimension_numbers<[1], [0], [0], [1], [0, 0, 1, 1], [], []>} : vector<8x128xbf16>, vector<128x128xbf16>, vector<8x128xf32> -> vector<8x128xf32>
    %c0_21 = arith.constant 0 : index
    %c0_22 = arith.constant 0 : index
    %28 = vector.load %arg9[%c0_21, %c0_22] : memref<1x128xf32, #tpu.memory_space<vmem>>, vector<1x128xf32>
    %29 = vector.broadcast %28 : vector<1x128xf32> to vector<8x128xf32>
    %30 = arith.addf %27, %29 : vector<8x128xf32>
    %cst_23 = arith.constant 0.000000e+00 : f32
    %31 = vector.broadcast %cst_23 : f32 to vector<8x128xf32>
    %32 = arith.maximumf %30, %31 : vector<8x128xf32>
    %33 = arith.truncf %32 : vector<8x128xf32> to vector<8x128xbf16>
    %c0_24 = arith.constant 0 : index
    %c0_25 = arith.constant 0 : index
    %34 = vector.load %arg10[%c0_24, %c0_25] : memref<128x128xbf16, #tpu.memory_space<vmem>>, vector<128x128xbf16>
    %cst_26 = arith.constant dense<0.000000e+00> : vector<8x128xf32>
    %35 = tpu.matmul %33, %34, %cst_26 {dimension_numbers = #tpu.dot_dimension_numbers<[1], [0], [0], [1], [0, 0, 1, 1], [], []>} : vector<8x128xbf16>, vector<128x128xbf16>, vector<8x128xf32> -> vector<8x128xf32>
    %c0_27 = arith.constant 0 : index
    %c0_28 = arith.constant 0 : index
    %36 = vector.load %arg11[%c0_27, %c0_28] : memref<1x128xf32, #tpu.memory_space<vmem>>, vector<1x128xf32>
    %37 = vector.broadcast %36 : vector<1x128xf32> to vector<8x128xf32>
    %38 = arith.addf %35, %37 : vector<8x128xf32>
    %cst_29 = arith.constant 0.000000e+00 : f32
    %39 = vector.broadcast %cst_29 : f32 to vector<8x128xf32>
    %40 = arith.maximumf %38, %39 : vector<8x128xf32>
    %c0_30 = arith.constant 0 : index
    %c0_31 = arith.constant 0 : index
    %41 = vector.load %arg12[%c0_30, %c0_31] : memref<8x128xf32, #tpu.memory_space<vmem>>, vector<8x128xf32>
    tpu.vector_store %arg12[%c0_30, %c0_31], %40 {strides = array<i32>} : memref<8x128xf32, #tpu.memory_space<vmem>>, vector<8x128xf32>,
    return
  }
  func.func @transform_0(%arg0: i32) -> (i32, i32) {
    %c0_i32 = arith.constant 0 : i32
    %c0_i32_0 = arith.constant 0 : i32
    return %arg0, %c0_i32 : i32, i32
  }
  func.func @transform_1(%arg0: i32) -> (i32, i32) {
    %c0_i32 = arith.constant 0 : i32
    %c0_i32_0 = arith.constant 0 : i32
    %c0_i32_1 = arith.constant 0 : i32
    return %c0_i32, %c0_i32_0 : i32, i32
  }
  func.func @transform_2(%arg0: i32) -> (i32, i32) {
    %c0_i32 = arith.constant 0 : i32
    %c0_i32_0 = arith.constant 0 : i32
    %c0_i32_1 = arith.constant 0 : i32
    return %c0_i32, %c0_i32_0 : i32, i32
  }
  func.func @transform_3(%arg0: i32) -> (i32, i32) {
    %c0_i32 = arith.constant 0 : i32
    %c0_i32_0 = arith.constant 0 : i32
    %c0_i32_1 = arith.constant 0 : i32
    return %c0_i32, %c0_i32_0 : i32, i32
  }
  func.func @transform_4(%arg0: i32) -> (i32, i32) {
    %c0_i32 = arith.constant 0 : i32
    %c0_i32_0 = arith.constant 0 : i32
    %c0_i32_1 = arith.constant 0 : i32
    return %c0_i32, %c0_i32_0 : i32, i32
  }
  func.func @transform_5(%arg0: i32) -> (i32, i32) {
    %c0_i32 = arith.constant 0 : i32
    %c0_i32_0 = arith.constant 0 : i32
    %c0_i32_1 = arith.constant 0 : i32
    return %c0_i32, %c0_i32_0 : i32, i32
  }
  func.func @transform_6(%arg0: i32) -> (i32, i32) {
    %c0_i32 = arith.constant 0 : i32
    %c0_i32_0 = arith.constant 0 : i32
    %c0_i32_1 = arith.constant 0 : i32
    return %c0_i32, %c0_i32_0 : i32, i32
  }
  func.func @transform_7(%arg0: i32) -> (i32, i32) {
    %c0_i32 = arith.constant 0 : i32
    %c0_i32_0 = arith.constant 0 : i32
    %c0_i32_1 = arith.constant 0 : i32
    return %c0_i32, %c0_i32_0 : i32, i32
  }
  func.func @transform_8(%arg0: i32) -> (i32, i32) {
    %c0_i32 = arith.constant 0 : i32
    %c0_i32_0 = arith.constant 0 : i32
    %c0_i32_1 = arith.constant 0 : i32
    return %c0_i32, %c0_i32_0 : i32, i32
  }
  func.func @transform_9(%arg0: i32) -> (i32, i32) {
    %c0_i32 = arith.constant 0 : i32
    %c0_i32_0 = arith.constant 0 : i32
    %c0_i32_1 = arith.constant 0 : i32
    return %c0_i32, %c0_i32_0 : i32, i32
  }
  func.func @transform_10(%arg0: i32) -> (i32, i32) {
    %c0_i32 = arith.constant 0 : i32
    %c0_i32_0 = arith.constant 0 : i32
    %c0_i32_1 = arith.constant 0 : i32
    return %c0_i32, %c0_i32_0 : i32, i32
  }
  func.func @transform_11(%arg0: i32) -> (i32, i32) {
    %c0_i32 = arith.constant 0 : i32
    %c0_i32_0 = arith.constant 0 : i32
    return %arg0, %c0_i32 : i32, i32
  }
}

</mosaic_0001>

<llo_original>
// kernel: rpe_model_forward.1
$region0: #{rpe_model_forward.1}
  #allocation0 [shape = 'u32[]', space=smem, size = 0x4, offset = 0x4, fixed_abs, tag = 'smem constant byte address 0x4 - core index']
  #allocation1 [shape = 'u32[144,128]{1,0:T(1,128)}', space=vmem, size = 0x12000, scoped, tag = 'internal scratch']
  %s0 = inlined_call_operand.vmem [shape: f32[8,32], index: 0, kind: input, shape index: {}]
  %s1 = inlined_call_operand.vmem [shape: bf16[32,128], index: 1, kind: input, shape index: {}]
  %s2 = inlined_call_operand.vmem [shape: f32[1,128], index: 2, kind: input, shape index: {}]
  %s3 = inlined_call_operand.vmem [shape: bf16[128,256], index: 3, kind: input, shape index: {}]
  %s4 = inlined_call_operand.vmem [shape: f32[1,256], index: 4, kind: input, shape index: {}]
  %s5 = inlined_call_operand.vmem [shape: bf16[256,128], index: 5, kind: input, shape index: {}]
  %s6 = inlined_call_operand.vmem [shape: f32[1,128], index: 6, kind: input, shape index: {}]
  %s7 = inlined_call_operand.vmem [shape: bf16[128,128], index: 7, kind: input, shape index: {}]
  %s8 = inlined_call_operand.vmem [shape: f32[1,128], index: 8, kind: input, shape index: {}]
  %s9 = inlined_call_operand.vmem [shape: bf16[128,128], index: 9, kind: input, shape index: {}]
  %s10 = inlined_call_operand.vmem [shape: f32[1,128], index: 10, kind: input, shape index: {}]
  %s11 = inlined_call_operand.hbm [shape: f32[8,128], index: 11, kind: output, shape index: {}]
  %s12 = sld [smem:[#allocation0]]
  $region54: #{rpe_model_forward.1} parent=0
    _
  %s14 = ssub.s32 1, %s12
  %s15 = scalar_select 0, %s14, %s12
  $region1: #{rpe_model_forward.1} parent=0
    #allocation2 [shape = 'u8[4096]{0}', space=vmem, size = 0x1000, scoped, tag = 'output window, operand 0, single buffered']
    #allocation3 [shape = 's32[1]{0}', space=sflag, size = 0x4, scoped, tag = 'scoped memory for rpe_model_forward.1']
    %16 = vsyncpa [#allocation3], 0
    // Predicated region
    $region2: #{rpe_model_forward.1} parent=1 // pred_check
      _
    $region3: #{rpe_model_forward.1} parent=1 // pred_check_branch
      %18 = sbr.rel (0) target = $region5
    $region4: #{rpe_model_forward.1} parent=1 // pred_region
      _
    $region5: #{rpe_model_forward.1} parent=1 // pred_fallthru
      _
    // Predicated region
    $region6: #{rpe_model_forward.1} parent=1 // pred_check
      _
    $region7: #{rpe_model_forward.1} parent=1 // pred_check_branch
      %20 = sbr.rel (0) target = $region9
    $region8: #{rpe_model_forward.1} parent=1 // pred_region
      _
    $region9: #{rpe_model_forward.1} parent=1 // pred_fallthru
      _
    // Predicated region
    $region10: #{rpe_model_forward.1} parent=1 // pred_check
      _
    $region11: #{rpe_model_forward.1} parent=1 // pred_check_branch
      %22 = sbr.rel (0) target = $region13
    $region12: #{rpe_model_forward.1} parent=1 // pred_region
      _
    $region13: #{rpe_model_forward.1} parent=1 // pred_fallthru
      _
    // Predicated region
    $region14: #{rpe_model_forward.1} parent=1 // pred_check
      _
    $region15: #{rpe_model_forward.1} parent=1 // pred_check_branch
      %24 = sbr.rel (0) target = $region17
    $region16: #{rpe_model_forward.1} parent=1 // pred_region
      _
    $region17: #{rpe_model_forward.1} parent=1 // pred_fallthru
      _
    // Predicated region
    $region18: #{rpe_model_forward.1} parent=1 // pred_check
      _
    $region19: #{rpe_model_forward.1} parent=1 // pred_check_branch
      %26 = sbr.rel (0) target = $region21
    $region20: #{rpe_model_forward.1} parent=1 // pred_region
      _
    $region21: #{rpe_model_forward.1} parent=1 // pred_fallthru
      _
    // Predicated region
    $region22: #{rpe_model_forward.1} parent=1 // pred_check
      _
    $region23: #{rpe_model_forward.1} parent=1 // pred_check_branch
      %28 = sbr.rel (0) target = $region25
    $region24: #{rpe_model_forward.1} parent=1 // pred_region
      _
    $region25: #{rpe_model_forward.1} parent=1 // pred_fallthru
      _
    // Predicated region
    $region26: #{rpe_model_forward.1} parent=1 // pred_check
      _
    $region27: #{rpe_model_forward.1} parent=1 // pred_check_branch
      %30 = sbr.rel (0) target = $region29
    $region28: #{rpe_model_forward.1} parent=1 // pred_region
      _
    $region29: #{rpe_model_forward.1} parent=1 // pred_fallthru
      _
    // Predicated region
    $region30: #{rpe_model_forward.1} parent=1 // pred_check
      _
    $region31: #{rpe_model_forward.1} parent=1 // pred_check_branch
      %32 = sbr.rel (0) target = $region33
    $region32: #{rpe_model_forward.1} parent=1 // pred_region
      _
    $region33: #{rpe_model_forward.1} parent=1 // pred_fallthru
      _
    // Predicated region
    $region34: #{rpe_model_forward.1} parent=1 // pred_check
      _
    $region35: #{rpe_model_forward.1} parent=1 // pred_check_branch
      %34 = sbr.rel (0) target = $region37
    $region36: #{rpe_model_forward.1} parent=1 // pred_region
      _
    $region37: #{rpe_model_forward.1} parent=1 // pred_fallthru
      _
    // Predicated region
    $region38: #{rpe_model_forward.1} parent=1 // pred_check
      _
    $region39: #{rpe_model_forward.1} parent=1 // pred_check_branch
      %36 = sbr.rel (0) target = $region41
    $region40: #{rpe_model_forward.1} parent=1 // pred_region
      _
    $region41: #{rpe_model_forward.1} parent=1 // pred_fallthru
      _
    // Predicated region
    $region42: #{rpe_model_forward.1} parent=1 // pred_check
      _
    $region43: #{rpe_model_forward.1} parent=1 // pred_check_branch
      %38 = sbr.rel (0) target = $region45
    $region44: #{rpe_model_forward.1} parent=1 // pred_region
      _
    $region45: #{rpe_model_forward.1} parent=1 // pred_fallthru
      _
    %v40 = vld [vmem:[%s0] sm:$0xff]
    %v41 = vpack.c.bf16 %v40, %v40
    %v42 = vld [vmem:[%s1] sm:$0xf]
    %v43 = vld [vmem:[%s1 + $0x4] sm:$0xf]
    %v44 = vld [vmem:[%s1 + $0x8] sm:$0xf]
    %v45 = vld [vmem:[%s1 + $0xc] sm:$0xf]
    %v46 = vld [vmem:[%s2] sm:$0x1]
    %v48 = vlaneseq
    %v49 = vshrl.u32 %v48, 7
    %v50 = vsub.s32 0, %v49
    %v51 = vrot.slane %v46, %v50
    %v57 = vunpack.c.l.b16 %v42
    %v58 = vunpack.c.l.b16 %v43
    %v59 = vunpack.c.l.b16 %v44
    %v60 = vunpack.c.l.b16 %v45
    %v61 = vpack.c.b16 %v58, %v57
    %v62 = vpack.c.b16 %v60, %v59
    %vm65 = vcmask 261120
    %v67 = vsel %vm65, %v41, 0
    %69 = vmatprep.subr.bf16.mxu0 0
    %70 = vmatpush1.bf16.msra.mxu0 0
    %71 = vmatprep.subr.bf16.mxu0 0
    %72 = vmatpush1.bf16.msra.mxu0 0
    %73 = vmatprep.subr.bf16.mxu0 0
    %74 = vmatpush1.bf16.msra.mxu0 0
    %75 = vmatprep.subr.bf16.mxu0 0
    %76 = vmatpush1.bf16.msra.mxu0 0
    %77 = vmatprep.subr.bf16.mxu0 0
    %78 = vmatpush1.bf16.msra.mxu0 0
    %79 = vmatprep.subr.bf16.mxu0 0
    %80 = vmatpush1.bf16.msra.mxu0 0
    %81 = vmatprep.subr.bf16.mxu0 0
    %82 = vmatpush1.bf16.msra.mxu0 %v62
    %83 = vmatprep.subr.bf16.mxu0 0
    %84 = vmatpush1.bf16.msra.mxu0 %v61
    %85 = vmatprep.subr.bf16.mxu0 0
    %86 = vmatpush2.bf16.msra.mxu0 0
    %87 = vmatprep.subr.bf16.mxu0 0
    %88 = vmatpush2.bf16.msra.mxu0 0
    %89 = vmatprep.subr.bf16.mxu0 0
    %90 = vmatpush2.bf16.msra.mxu0 0
    %91 = vmatprep.subr.bf16.mxu0 0
    %92 = vmatpush2.bf16.msra.mxu0 0
    %93 = vmatprep.subr.bf16.mxu0 0
    %94 = vmatpush2.bf16.msra.mxu0 0
    %95 = vmatprep.subr.bf16.mxu0 0
    %96 = vmatpush2.bf16.msra.mxu0 0
    %97 = vmatprep.subr.bf16.mxu0 0
    %98 = vmatpush2.bf16.msra.mxu0 0
    %99 = vmatprep.subr.bf16.mxu0 0
    %100 = vmatpush2.bf16.msra.mxu0 0
    %101 = vmatprep.mubr.bf16.mxu0 0
    %102 = vmatmul.mubr.bf16.gmra.mxu0 %v67
    %v103 = vpop.f32.mrf.mxu0
    %v104 = vadd.f32 %v51, %v103
    %v105 = vpop.f32.mrf.mxu0
    %v106 = vpop.f32.mrf.mxu0
    %v107 = vpop.f32.mrf.mxu0
    %108 = vdwg.mxu0
    %v109 = vmax.f32 %v104, 0.0
    %v110 = vpack.c.bf16 %v109, %v109
    %v111 = vld [vmem:[%s3] sm:$0xff]
    %v112 = vld [vmem:[%s3 + $0x8] sm:$0xff]
    %v113 = vld [vmem:[%s3 + $0x10] sm:$0xff]
    %v114 = vld [vmem:[%s3 + $0x18] sm:$0xff]
    %v115 = vld [vmem:[%s3 + $0x20] sm:$0xff]
    %v116 = vld [vmem:[%s3 + $0x28] sm:$0xff]
    %v117 = vld [vmem:[%s3 + $0x30] sm:$0xff]
    %v118 = vld [vmem:[%s3 + $0x38] sm:$0xff]
    %v119 = vld [vmem:[%s3 + $0x40] sm:$0xff]
    %v120 = vld [vmem:[%s3 + $0x48] sm:$0xff]
    %v121 = vld [vmem:[%s3 + $0x50] sm:$0xff]
    %v122 = vld [vmem:[%s3 + $0x58] sm:$0xff]
    %v123 = vld [vmem:[%s3 + $0x60] sm:$0xff]
    %v124 = vld [vmem:[%s3 + $0x68] sm:$0xff]
    %v125 = vld [vmem:[%s3 + $0x70] sm:$0xff]
    %v126 = vld [vmem:[%s3 + $0x78] sm:$0xff]
    %v127 = vld [vmem:[%s4] sm:$0x3]
    %v129 = vlaneseq
    %v130 = vshrl.u32 %v129, 7
    %v131 = vsub.s32 0, %v130
    %v132 = vrot.slane %v127, %v131
    %v133 = vlaneseq
    %v134 = vshrl.u32 %v133, 7
    %v135 = vsub.s32 1, %v134
    %v136 = vrot.slane %v127, %v135
    %v155 = vunpack.c.l.b16 %v111
    %v156 = vunpack.c.h.b16 %v111
    %v157 = vunpack.c.l.b16 %v112
    %v158 = vunpack.c.h.b16 %v112
    %v159 = vunpack.c.l.b16 %v113
    %v160 = vunpack.c.h.b16 %v113
    %v161 = vunpack.c.l.b16 %v114
    %v162 = vunpack.c.h.b16 %v114
    %v163 = vunpack.c.l.b16 %v115
    %v164 = vunpack.c.h.b16 %v115
    %v165 = vunpack.c.l.b16 %v116
    %v166 = vunpack.c.h.b16 %v116
    %v167 = vunpack.c.l.b16 %v117
    %v168 = vunpack.c.h.b16 %v117
    %v169 = vunpack.c.l.b16 %v118
    %v170 = vunpack.c.h.b16 %v118
    %v171 = vunpack.c.l.b16 %v119
    %v172 = vunpack.c.h.b16 %v119
    %v173 = vunpack.c.l.b16 %v120
    %v174 = vunpack.c.h.b16 %v120
    %v175 = vunpack.c.l.b16 %v121
    %v176 = vunpack.c.h.b16 %v121
    %v177 = vunpack.c.l.b16 %v122
    %v178 = vunpack.c.h.b16 %v122
    %v179 = vunpack.c.l.b16 %v123
    %v180 = vunpack.c.h.b16 %v123
    %v181 = vunpack.c.l.b16 %v124
    %v182 = vunpack.c.h.b16 %v124
    %v183 = vunpack.c.l.b16 %v125
    %v184 = vunpack.c.h.b16 %v125
    %v185 = vunpack.c.l.b16 %v126
    %v186 = vunpack.c.h.b16 %v126
    %v187 = vpack.c.b16 %v157, %v155
    %v188 = vpack.c.b16 %v158, %v156
    %v189 = vpack.c.b16 %v161, %v159
    %v190 = vpack.c.b16 %v162, %v160
    %v191 = vpack.c.b16 %v165, %v163
    %v192 = vpack.c.b16 %v166, %v164
    %v193 = vpack.c.b16 %v169, %v167
    %v194 = vpack.c.b16 %v170, %v168
    %v195 = vpack.c.b16 %v173, %v171
    %v196 = vpack.c.b16 %v174, %v172
    %v197 = vpack.c.b16 %v177, %v175
    %v198 = vpack.c.b16 %v178, %v176
    %v199 = vpack.c.b16 %v181, %v179
    %v200 = vpack.c.b16 %v182, %v180
    %v201 = vpack.c.b16 %v185, %v183
    %v202 = vpack.c.b16 %v186, %v184
    %219 = vmatprep.subr.bf16.mxu0 %v202
    %220 = vmatpush1.bf16.msra.mxu0 %v201
    %221 = vmatprep.subr.bf16.mxu0 %v200
    %222 = vmatpush1.bf16.msra.mxu0 %v199
    %223 = vmatprep.subr.bf16.mxu0 %v198
    %224 = vmatpush1.bf16.msra.mxu0 %v197
    %225 = vmatprep.subr.bf16.mxu0 %v196
    %226 = vmatpush1.bf16.msra.mxu0 %v195
    %227 = vmatprep.subr.bf16.mxu0 %v194
    %228 = vmatpush1.bf16.msra.mxu0 %v193
    %229 = vmatprep.subr.bf16.mxu0 %v192
    %230 = vmatpush1.bf16.msra.mxu0 %v191
    %231 = vmatprep.subr.bf16.mxu0 %v190
    %232 = vmatpush1.bf16.msra.mxu0 %v189
    %233 = vmatprep.subr.bf16.mxu0 %v188
    %234 = vmatpush1.bf16.msra.mxu0 %v187
    %235 = vmatprep.subr.bf16.mxu0 0
    %236 = vmatpush2.bf16.msra.mxu0 0
    %237 = vmatprep.subr.bf16.mxu0 0
    %238 = vmatpush2.bf16.msra.mxu0 0
    %239 = vmatprep.subr.bf16.mxu0 0
    %240 = vmatpush2.bf16.msra.mxu0 0
    %241 = vmatprep.subr.bf16.mxu0 0
    %242 = vmatpush2.bf16.msra.mxu0 0
    %243 = vmatprep.subr.bf16.mxu0 0
    %244 = vmatpush2.bf16.msra.mxu0 0
    %245 = vmatprep.subr.bf16.mxu0 0
    %246 = vmatpush2.bf16.msra.mxu0 0
    %247 = vmatprep.subr.bf16.mxu0 0
    %248 = vmatpush2.bf16.msra.mxu0 0
    %249 = vmatprep.subr.bf16.mxu0 0
    %250 = vmatpush2.bf16.msra.mxu0 0
    %251 = vmatprep.mubr.bf16.mxu0 0
    %252 = vmatmul.mubr.bf16.gmra.mxu0 %v110
    %v253 = vpop.f32.mrf.mxu0
    %v254 = vadd.f32 %v132, %v253
    %v255 = vpop.f32.mrf.mxu0
    %v256 = vadd.f32 %v136, %v255
    %v257 = vpop.f32.mrf.mxu0
    %v258 = vpop.f32.mrf.mxu0
    %259 = vdwg.mxu0
    %v260 = vmax.f32 %v254, 0.0
    %v261 = vmax.f32 %v256, 0.0
    %v262 = vpack.c.bf16 %v260, %v260
    %v263 = vpack.c.bf16 %v261, %v261
    %v264 = vld [vmem:[%s5] sm:$0xf]
    %v265 = vld [vmem:[%s5 + $0x4] sm:$0xf]
    %v266 = vld [vmem:[%s5 + $0x8] sm:$0xf]
    %v267 = vld [vmem:[%s5 + $0xc] sm:$0xf]
    %v268 = vld [vmem:[%s5 + $0x10] sm:$0xf]
    %v269 = vld [vmem:[%s5 + $0x14] sm:$0xf]
    %v270 = vld [vmem:[%s5 + $0x18] sm:$0xf]
    %v271 = vld [vmem:[%s5 + $0x1c] sm:$0xf]
    %v272 = vld [vmem:[%s5 + $0x20] sm:$0xf]
    %v273 = vld [vmem:[%s5 + $0x24] sm:$0xf]
    %v274 = vld [vmem:[%s5 + $0x28] sm:$0xf]
    %v275 = vld [vmem:[%s5 + $0x2c] sm:$0xf]
    %v276 = vld [vmem:[%s5 + $0x30] sm:$0xf]
    %v277 = vld [vmem:[%s5 + $0x34] sm:$0xf]
    %v278 = vld [vmem:[%s5 + $0x38] sm:$0xf]
    %v279 = vld [vmem:[%s5 + $0x3c] sm:$0xf]
    %v280 = vld [vmem:[%s5 + $0x40] sm:$0xf]
    %v281 = vld [vmem:[%s5 + $0x44] sm:$0xf]
    %v282 = vld [vmem:[%s5 + $0x48] sm:$0xf]
    %v283 = vld [vmem:[%s5 + $0x4c] sm:$0xf]
    %v284 = vld [vmem:[%s5 + $0x50] sm:$0xf]
    %v285 = vld [vmem:[%s5 + $0x54] sm:$0xf]
    %v286 = vld [vmem:[%s5 + $0x58] sm:$0xf]
    %v287 = vld [vmem:[%s5 + $0x5c] sm:$0xf]
    %v288 = vld [vmem:[%s5 + $0x60] sm:$0xf]
    %v289 = vld [vmem:[%s5 + $0x64] sm:$0xf]
    %v290 = vld [vmem:[%s5 + $0x68] sm:$0xf]
    %v291 = vld [vmem:[%s5 + $0x6c] sm:$0xf]
    %v292 = vld [vmem:[%s5 + $0x70] sm:$0xf]
    %v293 = vld [vmem:[%s5 + $0x74] sm:$0xf]
    %v294 = vld [vmem:[%s5 + $0x78] sm:$0xf]
    %v295 = vld [vmem:[%s5 + $0x7c] sm:$0xf]
    %v296 = vld [vmem:[%s6] sm:$0x1]
    %v298 = vlaneseq
    %v299 = vshrl.u32 %v298, 7
    %v300 = vsub.s32 0, %v299
    %v301 = vrot.slane %v296, %v300
    %v335 = vunpack.c.l.b16 %v264
    %v336 = vunpack.c.l.b16 %v265
    %v337 = vunpack.c.l.b16 %v266
    %v338 = vunpack.c.l.b16 %v267
    %v339 = vunpack.c.l.b16 %v268
    %v340 = vunpack.c.l.b16 %v269
    %v341 = vunpack.c.l.b16 %v270
    %v342 = vunpack.c.l.b16 %v271
    %v343 = vunpack.c.l.b16 %v272
    %v344 = vunpack.c.l.b16 %v273
    %v345 = vunpack.c.l.b16 %v274
    %v346 = vunpack.c.l.b16 %v275
    %v347 = vunpack.c.l.b16 %v276
    %v348 = vunpack.c.l.b16 %v277
    %v349 = vunpack.c.l.b16 %v278
    %v350 = vunpack.c.l.b16 %v279
    %v351 = vunpack.c.l.b16 %v280
    %v352 = vunpack.c.l.b16 %v281
    %v353 = vunpack.c.l.b16 %v282
    %v354 = vunpack.c.l.b16 %v283
    %v355 = vunpack.c.l.b16 %v284
    %v356 = vunpack.c.l.b16 %v285
    %v357 = vunpack.c.l.b16 %v286
    %v358 = vunpack.c.l.b16 %v287
    %v359 = vunpack.c.l.b16 %v288
    %v360 = vunpack.c.l.b16 %v289
    %v361 = vunpack.c.l.b16 %v290
    %v362 = vunpack.c.l.b16 %v291
    %v363 = vunpack.c.l.b16 %v292
    %v364 = vunpack.c.l.b16 %v293
    %v365 = vunpack.c.l.b16 %v294
    %v366 = vunpack.c.l.b16 %v295
    %v367 = vpack.c.b16 %v336, %v335
    %v368 = vpack.c.b16 %v338, %v337
    %v369 = vpack.c.b16 %v340, %v339
    %v370 = vpack.c.b16 %v342, %v341
    %v371 = vpack.c.b16 %v344, %v343
    %v372 = vpack.c.b16 %v346, %v345
    %v373 = vpack.c.b16 %v348, %v347
    %v374 = vpack.c.b16 %v350, %v349
    %v375 = vpack.c.b16 %v352, %v351
    %v376 = vpack.c.b16 %v354, %v353
    %v377 = vpack.c.b16 %v356, %v355
    %v378 = vpack.c.b16 %v358, %v357
    %v379 = vpack.c.b16 %v360, %v359
    %v380 = vpack.c.b16 %v362, %v361
    %v381 = vpack.c.b16 %v364, %v363
    %v382 = vpack.c.b16 %v366, %v365
    %399 = vmatprep.subr.bf16.mxu0 0
    %400 = vmatpush1.bf16.msra.mxu0 %v374
    %401 = vmatprep.subr.bf16.mxu0 0
    %402 = vmatpush1.bf16.msra.mxu0 %v373
    %403 = vmatprep.subr.bf16.mxu0 0
    %404 = vmatpush1.bf16.msra.mxu0 %v372
    %405 = vmatprep.subr.bf16.mxu0 0
    %406 = vmatpush1.bf16.msra.mxu0 %v371
    %407 = vmatprep.subr.bf16.mxu0 0
    %408 = vmatpush1.bf16.msra.mxu0 %v370
    %409 = vmatprep.subr.bf16.mxu0 0
    %410 = vmatpush1.bf16.msra.mxu0 %v369
    %411 = vmatprep.subr.bf16.mxu0 0
    %412 = vmatpush1.bf16.msra.mxu0 %v368
    %413 = vmatprep.subr.bf16.mxu0 0
    %414 = vmatpush1.bf16.msra.mxu0 %v367
    %415 = vmatprep.subr.bf16.mxu0 0
    %416 = vmatpush2.bf16.msra.mxu0 %v382
    %417 = vmatprep.subr.bf16.mxu0 0
    %418 = vmatpush2.bf16.msra.mxu0 %v381
    %419 = vmatprep.subr.bf16.mxu0 0
    %420 = vmatpush2.bf16.msra.mxu0 %v380
    %421 = vmatprep.subr.bf16.mxu0 0
    %422 = vmatpush2.bf16.msra.mxu0 %v379
    %423 = vmatprep.subr.bf16.mxu0 0
    %424 = vmatpush2.bf16.msra.mxu0 %v378
    %425 = vmatprep.subr.bf16.mxu0 0
    %426 = vmatpush2.bf16.msra.mxu0 %v377
    %427 = vmatprep.subr.bf16.mxu0 0
    %428 = vmatpush2.bf16.msra.mxu0 %v376
    %429 = vmatprep.subr.bf16.mxu0 0
    %430 = vmatpush2.bf16.msra.mxu0 %v375
    %431 = vmatprep.mubr.bf16.mxu0 %v263
    %432 = vmatmul.mubr.bf16.gmra.mxu0 %v262
    %v433 = vpop.f32.mrf.mxu0
    %v434 = vadd.f32 %v301, %v433
    %v435 = vpop.f32.mrf.mxu0
    %v436 = vpop.f32.mrf.mxu0
    %v437 = vpop.f32.mrf.mxu0
    %438 = vdwg.mxu0
    %v439 = vmax.f32 %v434, 0.0
    %v440 = vpack.c.bf16 %v439, %v439
    %v441 = vld [vmem:[%s7] sm:$0xf]
    %v442 = vld [vmem:[%s7 + $0x4] sm:$0xf]
    %v443 = vld [vmem:[%s7 + $0x8] sm:$0xf]
    %v444 = vld [vmem:[%s7 + $0xc] sm:$0xf]
    %v445 = vld [vmem:[%s7 + $0x10] sm:$0xf]
    %v446 = vld [vmem:[%s7 + $0x14] sm:$0xf]
    %v447 = vld [vmem:[%s7 + $0x18] sm:$0xf]
    %v448 = vld [vmem:[%s7 + $0x1c] sm:$0xf]
    %v449 = vld [vmem:[%s7 + $0x20] sm:$0xf]
    %v450 = vld [vmem:[%s7 + $0x24] sm:$0xf]
    %v451 = vld [vmem:[%s7 + $0x28] sm:$0xf]
    %v452 = vld [vmem:[%s7 + $0x2c] sm:$0xf]
    %v453 = vld [vmem:[%s7 + $0x30] sm:$0xf]
    %v454 = vld [vmem:[%s7 + $0x34] sm:$0xf]
    %v455 = vld [vmem:[%s7 + $0x38] sm:$0xf]
    %v456 = vld [vmem:[%s7 + $0x3c] sm:$0xf]
    %v457 = vld [vmem:[%s8] sm:$0x1]
    %v459 = vlaneseq
    %v460 = vshrl.u32 %v459, 7
    %v461 = vsub.s32 0, %v460
    %v462 = vrot.slane %v457, %v461
    %v480 = vunpack.c.l.b16 %v441
    %v481 = vunpack.c.l.b16 %v442
    %v482 = vunpack.c.l.b16 %v443
    %v483 = vunpack.c.l.b16 %v444
    %v484 = vunpack.c.l.b16 %v445
    %v485 = vunpack.c.l.b16 %v446
    %v486 = vunpack.c.l.b16 %v447
    %v487 = vunpack.c.l.b16 %v448
    %v488 = vunpack.c.l.b16 %v449
    %v489 = vunpack.c.l.b16 %v450
    %v490 = vunpack.c.l.b16 %v451
    %v491 = vunpack.c.l.b16 %v452
    %v492 = vunpack.c.l.b16 %v453
    %v493 = vunpack.c.l.b16 %v454
    %v494 = vunpack.c.l.b16 %v455
    %v495 = vunpack.c.l.b16 %v456
    %v496 = vpack.c.b16 %v481, %v480
    %v497 = vpack.c.b16 %v483, %v482
    %v498 = vpack.c.b16 %v485, %v484
    %v499 = vpack.c.b16 %v487, %v486
    %v500 = vpack.c.b16 %v489, %v488
    %v501 = vpack.c.b16 %v491, %v490
    %v502 = vpack.c.b16 %v493, %v492
    %v503 = vpack.c.b16 %v495, %v494
    %512 = vmatprep.subr.bf16.mxu0 0
    %513 = vmatpush1.bf16.msra.mxu0 %v503
    %514 = vmatprep.subr.bf16.mxu0 0
    %515 = vmatpush1.bf16.msra.mxu0 %v502
    %516 = vmatprep.subr.bf16.mxu0 0
    %517 = vmatpush1.bf16.msra.mxu0 %v501
    %518 = vmatprep.subr.bf16.mxu0 0
    %519 = vmatpush1.bf16.msra.mxu0 %v500
    %520 = vmatprep.subr.bf16.mxu0 0
    %521 = vmatpush1.bf16.msra.mxu0 %v499
    %522 = vmatprep.subr.bf16.mxu0 0
    %523 = vmatpush1.bf16.msra.mxu0 %v498
    %524 = vmatprep.subr.bf16.mxu0 0
    %525 = vmatpush1.bf16.msra.mxu0 %v497
    %526 = vmatprep.subr.bf16.mxu0 0
    %527 = vmatpush1.bf16.msra.mxu0 %v496
    %528 = vmatprep.subr.bf16.mxu0 0
    %529 = vmatpush2.bf16.msra.mxu0 0
    %530 = vmatprep.subr.bf16.mxu0 0
    %531 = vmatpush2.bf16.msra.mxu0 0
    %532 = vmatprep.subr.bf16.mxu0 0
    %533 = vmatpush2.bf16.msra.mxu0 0
    %534 = vmatprep.subr.bf16.mxu0 0
    %535 = vmatpush2.bf16.msra.mxu0 0
    %536 = vmatprep.subr.bf16.mxu0 0
    %537 = vmatpush2.bf16.msra.mxu0 0
    %538 = vmatprep.subr.bf16.mxu0 0
    %539 = vmatpush2.bf16.msra.mxu0 0
    %540 = vmatprep.subr.bf16.mxu0 0
    %541 = vmatpush2.bf16.msra.mxu0 0
    %542 = vmatprep.subr.bf16.mxu0 0
    %543 = vmatpush2.bf16.msra.mxu0 0
    %544 = vmatprep.mubr.bf16.mxu0 0
    %545 = vmatmul.mubr.bf16.gmra.mxu0 %v440
    %v546 = vpop.f32.mrf.mxu0
    %v547 = vadd.f32 %v462, %v546
    %v548 = vpop.f32.mrf.mxu0
    %v549 = vpop.f32.mrf.mxu0
    %v550 = vpop.f32.mrf.mxu0
    %551 = vdwg.mxu0
    %v552 = vmax.f32 %v547, 0.0
    %v553 = vpack.c.bf16 %v552, %v552
    %v554 = vld [vmem:[%s9] sm:$0xf]
    %v555 = vld [vmem:[%s9 + $0x4] sm:$0xf]
    %v556 = vld [vmem:[%s9 + $0x8] sm:$0xf]
    %v557 = vld [vmem:[%s9 + $0xc] sm:$0xf]
    %v558 = vld [vmem:[%s9 + $0x10] sm:$0xf]
    %v559 = vld [vmem:[%s9 + $0x14] sm:$0xf]
    %v560 = vld [vmem:[%s9 + $0x18] sm:$0xf]
    %v561 = vld [vmem:[%s9 + $0x1c] sm:$0xf]
    %v562 = vld [vmem:[%s9 + $0x20] sm:$0xf]
    %v563 = vld [vmem:[%s9 + $0x24] sm:$0xf]
    %v564 = vld [vmem:[%s9 + $0x28] sm:$0xf]
    %v565 = vld [vmem:[%s9 + $0x2c] sm:$0xf]
    %v566 = vld [vmem:[%s9 + $0x30] sm:$0xf]
    %v567 = vld [vmem:[%s9 + $0x34] sm:$0xf]
    %v568 = vld [vmem:[%s9 + $0x38] sm:$0xf]
    %v569 = vld [vmem:[%s9 + $0x3c] sm:$0xf]
    %v570 = vld [vmem:[%s10] sm:$0x1]
    %v572 = vlaneseq
    %v573 = vshrl.u32 %v572, 7
    %v574 = vsub.s32 0, %v573
    %v575 = vrot.slane %v570, %v574
    %v593 = vunpack.c.l.b16 %v554
    %v594 = vunpack.c.l.b16 %v555
    %v595 = vunpack.c.l.b16 %v556
    %v596 = vunpack.c.l.b16 %v557
    %v597 = vunpack.c.l.b16 %v558
    %v598 = vunpack.c.l.b16 %v559
    %v599 = vunpack.c.l.b16 %v560
    %v600 = vunpack.c.l.b16 %v561
    %v601 = vunpack.c.l.b16 %v562
    %v602 = vunpack.c.l.b16 %v563
    %v603 = vunpack.c.l.b16 %v564
    %v604 = vunpack.c.l.b16 %v565
    %v605 = vunpack.c.l.b16 %v566
    %v606 = vunpack.c.l.b16 %v567
    %v607 = vunpack.c.l.b16 %v568
    %v608 = vunpack.c.l.b16 %v569
    %v609 = vpack.c.b16 %v594, %v593
    %v610 = vpack.c.b16 %v596, %v595
    %v611 = vpack.c.b16 %v598, %v597
    %v612 = vpack.c.b16 %v600, %v599
    %v613 = vpack.c.b16 %v602, %v601
    %v614 = vpack.c.b16 %v604, %v603
    %v615 = vpack.c.b16 %v606, %v605
    %v616 = vpack.c.b16 %v608, %v607
    %625 = vmatprep.subr.bf16.mxu0 0
    %626 = vmatpush1.bf16.msra.mxu0 %v616
    %627 = vmatprep.subr.bf16.mxu0 0
    %628 = vmatpush1.bf16.msra.mxu0 %v615
    %629 = vmatprep.subr.bf16.mxu0 0
    %630 = vmatpush1.bf16.msra.mxu0 %v614
    %631 = vmatprep.subr.bf16.mxu0 0
    %632 = vmatpush1.bf16.msra.mxu0 %v613
    %633 = vmatprep.subr.bf16.mxu0 0
    %634 = vmatpush1.bf16.msra.mxu0 %v612
    %635 = vmatprep.subr.bf16.mxu0 0
    %636 = vmatpush1.bf16.msra.mxu0 %v611
    %637 = vmatprep.subr.bf16.mxu0 0
    %638 = vmatpush1.bf16.msra.mxu0 %v610
    %639 = vmatprep.subr.bf16.mxu0 0
    %640 = vmatpush1.bf16.msra.mxu0 %v609
    %641 = vmatprep.subr.bf16.mxu0 0
    %642 = vmatpush2.bf16.msra.mxu0 0
    %643 = vmatprep.subr.bf16.mxu0 0
    %644 = vmatpush2.bf16.msra.mxu0 0
    %645 = vmatprep.subr.bf16.mxu0 0
    %646 = vmatpush2.bf16.msra.mxu0 0
    %647 = vmatprep.subr.bf16.mxu0 0
    %648 = vmatpush2.bf16.msra.mxu0 0
    %649 = vmatprep.subr.bf16.mxu0 0
    %650 = vmatpush2.bf16.msra.mxu0 0
    %651 = vmatprep.subr.bf16.mxu0 0
    %652 = vmatpush2.bf16.msra.mxu0 0
    %653 = vmatprep.subr.bf16.mxu0 0
    %654 = vmatpush2.bf16.msra.mxu0 0
    %655 = vmatprep.subr.bf16.mxu0 0
    %656 = vmatpush2.bf16.msra.mxu0 0
    %657 = vmatprep.mubr.bf16.mxu0 0
    %658 = vmatmul.mubr.bf16.gmra.mxu0 %v553
    %v659 = vpop.f32.mrf.mxu0
    %v660 = vadd.f32 %v575, %v659
    %v661 = vpop.f32.mrf.mxu0
    %v662 = vpop.f32.mrf.mxu0
    %v663 = vpop.f32.mrf.mxu0
    %664 = vdwg.mxu0
    %v665 = vmax.f32 %v660, 0.0
    %666 = vst [vmem:[#allocation2] sm:$0xff] %v665
    // Predicated region
    $region46: #{rpe_model_forward.1} parent=1 // pred_check
      _
    $region47: #{rpe_model_forward.1} parent=1 // pred_check_branch
      %668 = sbr.rel (0) target = $region49
    $region48: #{rpe_model_forward.1} parent=1 // pred_region
      %s670 = ssub.s32 128, 128
      %671 = vsyncadd [#allocation3], %s670
      %s673 = sshll.u32 [#allocation2], 4
      %s674 = int_to_ptr.vmem [resolvable:$true] %s673
      %676 = dma.vmem_to_hbm [thread:$0]  %s674, 128, %s11, [#allocation3]
    $region49: #{rpe_model_forward.1} parent=1 // pred_fallthru
      _
    // Predicated region
    $region50: #{rpe_model_forward.1} parent=1 // pred_check
      _
    $region51: #{rpe_model_forward.1} parent=1 // pred_check_branch
      %678 = sbr.rel (0) target = $region53
    $region52: #{rpe_model_forward.1} parent=1 // pred_region
      %679 = dma.done [#allocation3], 128
    $region53: #{rpe_model_forward.1} parent=1 // pred_fallthru
      _
    %680 = vsyncpa [#allocation3], 1

</llo_original>
